<compile_context>
chip_gen: v6e
topology: v6e:2x2x1
jax: 0.10.0
libtpu: 0.0.40
codegen_flags: <defaults>
</compile_context>

<pallas_src>
import jax
import jax.numpy as jnp
from jax.experimental import pallas as pl
from jax.experimental.pallas import tpu as pltpu

LN_EPS = 1e-5  # PyTorch nn.LayerNorm default


def _round_up(x, m):
    return (x + m - 1) // m * m


def _tpu_generation_info():
    """Returns (physical VMEM bytes, has-two-TensorCores) with safe fallbacks."""
    vmem_cap = None
    try:
        vmem_cap = int(pltpu.get_tpu_info().vmem_capacity_bytes)
    except Exception:
        vmem_cap = None
    kind = ""
    try:
        kind = jax.devices()[0].device_kind.lower()
    except Exception:
        pass
    two_tc = ("v7" in kind) or ("tpu7" in kind)
    if vmem_cap is None:
        vmem_cap = (64 if two_tc else 128) * 1024 * 1024
    return vmem_cap, two_tc


def _norm_bm(bm, batch):
    """Clamp a batch-tile size to the batch and the (8, *) sublane rule."""
    bm = min(bm, batch)
    if bm != batch:
        bm = max(8, _round_up(bm, 8))
        if bm >= batch:
            bm = batch
    return bm


def _pruned_to_logits_kernel(x_ref, mask_ref, gamma_ref, beta_ref, w_ref,
                             b_ref, o_ref, h_ref):
    # h = ReLU(LayerNorm(x * mask)) is computed once per batch tile (class-tile
    # j == 0) and cached in VMEM scratch; class tiles j > 0 only re-run the matmul
    # against their W^T slab (grid axis 1 is "arbitrary" so the cache is valid).
    @pl.when(pl.program_id(1) == 0)
    def _():
        x = x_ref[...].astype(jnp.float32)                  # (bm, D)
        xm = x * mask_ref[...]                              # pruning mask (f32)
        # LayerNorm over the true feature dim (block last dim == full D).
        mean = jnp.mean(xm, axis=-1, keepdims=True)
        xc = xm - mean
        var = jnp.mean(xc * xc, axis=-1, keepdims=True)     # two-pass variance
        xn = xc * jax.lax.rsqrt(var + LN_EPS)
        xn = xn * gamma_ref[...] + beta_ref[...]
        h_ref[...] = jnp.maximum(xn, 0.0)                   # ReLU

    # Linear on the MXU at the weight's native dtype, f32 accumulation.
    h = h_ref[...]
    out = jnp.dot(h.astype(w_ref.dtype), w_ref[...],
                  preferred_element_type=jnp.float32)
    out = out + b_ref[...]                                  # bias kept in f32
    o_ref[...] = out.astype(o_ref.dtype)


def prepare_params(pruning_mask, ln_gamma, ln_beta, w, b, *,
                   block_n=None, weight_dtype=None):
    """One-time parameter prep (do at module init, not per forward call).

    - transposes W to (D, C) so the kernel runs a plain row-major matmul,
    - pads the class dim only if it will actually be tiled (vocab-scale heads),
    - keeps the tiny resident LN/mask/bias params in f32 for accuracy,
    - optional weight_dtype=jnp.bfloat16 to feed the MXU in bf16 on v6e/v7x.
    """
    C, D = w.shape
    wt = w.T                                                # (D, C)
    if weight_dtype is not None:
        wt = wt.astype(weight_dtype)

    if block_n is None:
        block_n = C if C <= 4096 else 512                   # untiled for normal heads
    if block_n >= C:
        block_n, c_pad = C, C                               # untiled: no pad at all
    else:
        block_n = max(128, _round_up(block_n, 128))         # lane-dense class tiles
        c_pad = _round_up(C, block_n)

    if c_pad > C:
        wt = jnp.pad(wt, ((0, 0), (0, c_pad - C)))
        b = jnp.pad(b, (0, c_pad - C))

    return {
        "mask": pruning_mask.astype(jnp.float32).reshape(1, D),
        "gamma": ln_gamma.astype(jnp.float32).reshape(1, D),
        "beta": ln_beta.astype(jnp.float32).reshape(1, D),
        "wt": wt,                                           # (D, c_pad), native dtype
        "bias": b.astype(jnp.float32).reshape(1, c_pad),
        "num_classes": C,
        "block_n": block_n,
    }


def pruned_to_logits(x, params, *, block_m=None):
    """x: (B, D) -> logits (B, C).  `params` comes from prepare_params()."""
    B, D = x.shape
    wt = params["wt"]
    C = params["num_classes"]
    block_n = params["block_n"]
    c_pad = wt.shape[1]
    assert wt.shape[0] == D
    grid_n = c_pad // block_n
    out_dtype = x.dtype

    vmem_cap, two_tc = _tpu_generation_info()
    budget = (vmem_cap * 3) // 4                            # ~96 MiB v5e/v6e, ~48 MiB v7x

    x_bytes = jnp.dtype(x.dtype).itemsize
    w_bytes = jnp.dtype(wt.dtype).itemsize
    o_bytes = jnp.dtype(out_dtype).itemsize

    def vmem_estimate(bm):
        return (2 * bm * D * x_bytes                              # x tiles (double-buffered)
                + 2 * bm * block_n * max(o_bytes, 4)              # out tiles
                + (1 if grid_n == 1 else 2) * D * block_n * w_bytes   # W^T
                + bm * D * 4                                      # h scratch
                + 4 * bm * D * 4                                  # f32 LN intermediates headroom
                + 3 * D * 4 + 2 * block_n * 4)                    # mask/gamma/beta/bias

    # --- batch tile size ------------------------------------------------------
    if block_m is None:
        block_m = B if B <= 1024 else 512
        # Only split the batch when there are two TensorCores to feed (v7x).
        if two_tc and grid_n == 1 and block_m == B and B >= 64:
            block_m = pl.cdiv(B, 2)
    block_m = _norm_bm(block_m, B)

    # Shrink against the generation-aware VMEM budget.
    while block_m > 8 and vmem_estimate(block_m) > budget:
        if block_m == B:
            nb = _norm_bm(pl.cdiv(B, 2), B)
            if nb == B:
                break
            block_m = nb
        else:
            block_m = _norm_bm(block_m // 2, B)

    grid_m = pl.cdiv(B, block_m)
    # Keep the step count even on 2-TC chips so both cores get equal work.
    if two_tc and grid_m > 1 and (grid_m % 2) == 1:
        cand = _norm_bm(pl.cdiv(B, grid_m + 1), B)
        if cand >= 8 and vmem_estimate(cand) <= budget:
            block_m = cand
            grid_m = pl.cdiv(B, block_m)

    vmem_limit = int(min(vmem_cap - 2 * 1024 * 1024,
                         max(budget, int(vmem_estimate(block_m) * 1.2),
                             32 * 1024 * 1024)))

    # --- BlockSpecs -----------------------------------------------------------
    single = pl.Buffered(1)
    if grid_n == 1:
        # Resident, constant-index W^T / bias: single-buffer to save VMEM.
        w_spec = pl.BlockSpec((D, block_n), lambda i, j: (0, j), pipeline_mode=single)
        b_spec = pl.BlockSpec((1, block_n), lambda i, j: (0, j), pipeline_mode=single)
    else:
        w_spec = pl.BlockSpec((D, block_n), lambda i, j: (0, j))
        b_spec = pl.BlockSpec((1, block_n), lambda i, j: (0, j))

    out = pl.pallas_call(
        _pruned_to_logits_kernel,
        out_shape=jax.ShapeDtypeStruct((B, C), out_dtype),
        grid_spec=pltpu.PrefetchScalarGridSpec(
            num_scalar_prefetch=0,
            grid=(grid_m, grid_n),
            in_specs=[
                pl.BlockSpec((block_m, D), lambda i, j: (i, 0)),              # x
                pl.BlockSpec((1, D), lambda i, j: (0, 0), pipeline_mode=single),  # mask
                pl.BlockSpec((1, D), lambda i, j: (0, 0), pipeline_mode=single),  # gamma
                pl.BlockSpec((1, D), lambda i, j: (0, 0), pipeline_mode=single),  # beta
                w_spec,                                                        # W^T
                b_spec,                                                        # bias
            ],
            out_specs=pl.BlockSpec((block_m, block_n), lambda i, j: (i, j)),
            scratch_shapes=[pltpu.VMEM((block_m, D), jnp.float32)],            # h cache
        ),
        compiler_params=pltpu.CompilerParams(
            dimension_semantics=("parallel", "arbitrary"),
            vmem_limit_bytes=vmem_limit),
    )(x, params["mask"], params["gamma"], params["beta"], wt, params["bias"])

    return out


def reference(x, pruning_mask, ln_gamma, ln_beta, w, b):
    xm = x * pruning_mask
    mean = jnp.mean(xm, axis=-1, keepdims=True)
    var = jnp.mean((xm - mean) ** 2, axis=-1, keepdims=True)
    xn = (xm - mean) / jnp.sqrt(var + LN_EPS) * ln_gamma + ln_beta
    h = jnp.maximum(xn, 0.0)
    return h @ w.T + b


if __name__ == "__main__":
    # Small shapes consistent with FTTransformer's to_logits head.
    B, D, C = 256, 32, 8

    key = jax.random.PRNGKey(0)
    kx, km, kg, kb, kw, kbias = jax.random.split(key, 6)

    x = jax.random.normal(kx, (B, D), dtype=jnp.float32)
    pruning_mask = (jax.random.uniform(km, (D,)) > 0.3).astype(jnp.float32)
    ln_gamma = 1.0 + 0.1 * jax.random.normal(kg, (D,), dtype=jnp.float32)
    ln_beta = 0.1 * jax.random.normal(kb, (D,), dtype=jnp.float32)
    w = jax.random.normal(kw, (C, D), dtype=jnp.float32) / jnp.sqrt(D)
    b = 0.01 * jax.random.normal(kbias, (C,), dtype=jnp.float32)

    # f32 path (exact vs reference). Parameter prep is done once, off the hot path.
    params = prepare_params(pruning_mask, ln_gamma, ln_beta, w, b)
    out = jax.block_until_ready(pruned_to_logits(x, params))
    ref = reference(x, pruning_mask, ln_gamma, ln_beta, w, b)
    assert out.shape == (B, C)
    assert jnp.allclose(out, ref, atol=1e-4, rtol=1e-4), "f32 mismatch vs reference"

    # bf16 activations/weights fed to the MXU (f32 accumulation); LN/mask/bias stay f32.
    params16 = prepare_params(pruning_mask, ln_gamma, ln_beta,
                              w.astype(jnp.bfloat16), b)
    out16 = jax.block_until_ready(pruned_to_logits(x.astype(jnp.bfloat16), params16))
    assert out16.shape == (B, C)
    assert jnp.allclose(out16.astype(jnp.float32), ref, atol=5e-2, rtol=5e-2), \
        "bf16 mismatch vs reference"

    print("KERNEL_OK")
</pallas_src>

<mosaic_0001>
module attributes {stable_mosaic.version = 11 : i64} {
  func.func @_pruned_to_logits_kernel(%arg0: i32, %arg1: i32, %arg2: memref<256x32xf32, #tpu.memory_space<vmem>>, %arg3: memref<1x32xf32, #tpu.memory_space<vmem>>, %arg4: memref<1x32xf32, #tpu.memory_space<vmem>>, %arg5: memref<1x32xf32, #tpu.memory_space<vmem>>, %arg6: memref<32x8xf32, #tpu.memory_space<vmem>>, %arg7: memref<1x8xf32, #tpu.memory_space<vmem>>, %arg8: memref<256x8xf32, #tpu.memory_space<vmem>>, %arg9: memref<256x32xf32, #tpu.memory_space<vmem>>) attributes {dimension_semantics = [#tpu.dimension_semantics<parallel>, #tpu.dimension_semantics<arbitrary>], iteration_bounds = array<i64: 1, 1>, scalar_prefetch = 0 : i64, scratch_operands = 1 : i64, tpu.core_type = #tpu.core_type<tc>, window_params = [{transform_indices = @transform_0, window_bounds = array<i64: 256, 32>}, {pipeline_mode = #tpu.pipeline_mode<synchronous>, transform_indices = @transform_1, window_bounds = array<i64: 1, 32>}, {pipeline_mode = #tpu.pipeline_mode<synchronous>, transform_indices = @transform_2, window_bounds = array<i64: 1, 32>}, {pipeline_mode = #tpu.pipeline_mode<synchronous>, transform_indices = @transform_3, window_bounds = array<i64: 1, 32>}, {pipeline_mode = #tpu.pipeline_mode<synchronous>, transform_indices = @transform_4, window_bounds = array<i64: 32, 8>}, {pipeline_mode = #tpu.pipeline_mode<synchronous>, transform_indices = @transform_5, window_bounds = array<i64: 1, 8>}, {transform_indices = @transform_6, window_bounds = array<i64: 256, 8>}]} {
    %c0_i32 = arith.constant 0 : i32
    %0 = arith.cmpi eq, %arg1, %c0_i32 : i32
    %1 = arith.extui %0 : i1 to i32
    %c0_i32_0 = arith.constant 0 : i32
    %2 = arith.cmpi ne, %1, %c0_i32_0 : i32
    scf.if %2 {
      %c0_8 = arith.constant 0 : index
      %c0_9 = arith.constant 0 : index
      %10 = vector.load %arg2[%c0_8, %c0_9] : memref<256x32xf32, #tpu.memory_space<vmem>>, vector<256x32xf32>
      %c0_10 = arith.constant 0 : index
      %c0_11 = arith.constant 0 : index
      %11 = vector.load %arg3[%c0_10, %c0_11] : memref<1x32xf32, #tpu.memory_space<vmem>>, vector<1x32xf32>
      %12 = vector.broadcast %11 : vector<1x32xf32> to vector<256x32xf32>
      %13 = arith.mulf %10, %12 : vector<256x32xf32>
      %cst_12 = arith.constant dense<0.000000e+00> : vector<256xf32>
      %14 = vector.multi_reduction <add>, %13, %cst_12 [1] : vector<256x32xf32> to vector<256xf32>
      %15 = vector.shape_cast %14 : vector<256xf32> to vector<256x1xf32>
      %cst_13 = arith.constant 3.200000e+01 : f32
      %16 = vector.broadcast %cst_13 : f32 to vector<256x1xf32>
      %17 = arith.divf %15, %16 : vector<256x1xf32>
      %18 = vector.broadcast %17 : vector<256x1xf32> to vector<256x32xf32>
      %19 = arith.subf %13, %18 : vector<256x32xf32>
      %20 = arith.mulf %19, %19 : vector<256x32xf32>
      %cst_14 = arith.constant dense<0.000000e+00> : vector<256xf32>
      %21 = vector.multi_reduction <add>, %20, %cst_14 [1] : vector<256x32xf32> to vector<256xf32>
      %22 = vector.shape_cast %21 : vector<256xf32> to vector<256x1xf32>
      %cst_15 = arith.constant 3.200000e+01 : f32
      %23 = vector.broadcast %cst_15 : f32 to vector<256x1xf32>
      %24 = arith.divf %22, %23 : vector<256x1xf32>
      %cst_16 = arith.constant 9.99999974E-6 : f32
      %25 = vector.broadcast %cst_16 : f32 to vector<256x1xf32>
      %26 = arith.addf %24, %25 : vector<256x1xf32>
      %27 = math.rsqrt %26 : vector<256x1xf32>
      %28 = vector.broadcast %27 : vector<256x1xf32> to vector<256x32xf32>
      %29 = arith.mulf %19, %28 : vector<256x32xf32>
      %c0_17 = arith.constant 0 : index
      %c0_18 = arith.constant 0 : index
      %30 = vector.load %arg4[%c0_17, %c0_18] : memref<1x32xf32, #tpu.memory_space<vmem>>, vector<1x32xf32>
      %31 = vector.broadcast %30 : vector<1x32xf32> to vector<256x32xf32>
      %32 = arith.mulf %29, %31 : vector<256x32xf32>
      %c0_19 = arith.constant 0 : index
      %c0_20 = arith.constant 0 : index
      %33 = vector.load %arg5[%c0_19, %c0_20] : memref<1x32xf32, #tpu.memory_space<vmem>>, vector<1x32xf32>
      %34 = vector.broadcast %33 : vector<1x32xf32> to vector<256x32xf32>
      %35 = arith.addf %32, %34 : vector<256x32xf32>
      %cst_21 = arith.constant 0.000000e+00 : f32
      %36 = vector.broadcast %cst_21 : f32 to vector<256x32xf32>
      %37 = arith.maximumf %35, %36 : vector<256x32xf32>
      %c0_22 = arith.constant 0 : index
      %c0_23 = arith.constant 0 : index
      %38 = vector.load %arg9[%c0_22, %c0_23] : memref<256x32xf32, #tpu.memory_space<vmem>>, vector<256x32xf32>
      tpu.vector_store %arg9[%c0_22, %c0_23], %37 {strides = array<i32>} : memref<256x32xf32, #tpu.memory_space<vmem>>, vector<256x32xf32>,
    } else {
    }
    %c0 = arith.constant 0 : index
    %c0_1 = arith.constant 0 : index
    %3 = vector.load %arg9[%c0, %c0_1] : memref<256x32xf32, #tpu.memory_space<vmem>>, vector<256x32xf32>
    %c0_2 = arith.constant 0 : index
    %c0_3 = arith.constant 0 : index
    %4 = vector.load %arg6[%c0_2, %c0_3] : memref<32x8xf32, #tpu.memory_space<vmem>>, vector<32x8xf32>
    %cst = arith.constant dense<0.000000e+00> : vector<256x8xf32>
    %5 = tpu.matmul %3, %4, %cst {dimension_numbers = #tpu.dot_dimension_numbers<[1], [0], [0], [1], [0, 0, 1, 1], [], []>} : vector<256x32xf32>, vector<32x8xf32>, vector<256x8xf32> -> vector<256x8xf32>
    %c0_4 = arith.constant 0 : index
    %c0_5 = arith.constant 0 : index
    %6 = vector.load %arg7[%c0_4, %c0_5] : memref<1x8xf32, #tpu.memory_space<vmem>>, vector<1x8xf32>
    %7 = vector.broadcast %6 : vector<1x8xf32> to vector<256x8xf32>
    %8 = arith.addf %5, %7 : vector<256x8xf32>
    %c0_6 = arith.constant 0 : index
    %c0_7 = arith.constant 0 : index
    %9 = vector.load %arg8[%c0_6, %c0_7] : memref<256x8xf32, #tpu.memory_space<vmem>>, vector<256x8xf32>
    tpu.vector_store %arg8[%c0_6, %c0_7], %8 {strides = array<i32>} : memref<256x8xf32, #tpu.memory_space<vmem>>, vector<256x8xf32>,
    return
  }
  func.func @transform_0(%arg0: i32, %arg1: i32) -> (i32, i32) {
    %c0_i32 = arith.constant 0 : i32
    %c0_i32_0 = arith.constant 0 : i32
    return %arg0, %c0_i32 : i32, i32
  }
  func.func @transform_1(%arg0: i32, %arg1: i32) -> (i32, i32) {
    %c0_i32 = arith.constant 0 : i32
    %c0_i32_0 = arith.constant 0 : i32
    %c0_i32_1 = arith.constant 0 : i32
    return %c0_i32, %c0_i32_0 : i32, i32
  }
  func.func @transform_2(%arg0: i32, %arg1: i32) -> (i32, i32) {
    %c0_i32 = arith.constant 0 : i32
    %c0_i32_0 = arith.constant 0 : i32
    %c0_i32_1 = arith.constant 0 : i32
    return %c0_i32, %c0_i32_0 : i32, i32
  }
  func.func @transform_3(%arg0: i32, %arg1: i32) -> (i32, i32) {
    %c0_i32 = arith.constant 0 : i32
    %c0_i32_0 = arith.constant 0 : i32
    %c0_i32_1 = arith.constant 0 : i32
    return %c0_i32, %c0_i32_0 : i32, i32
  }
  func.func @transform_4(%arg0: i32, %arg1: i32) -> (i32, i32) {
    %c0_i32 = arith.constant 0 : i32
    %c0_i32_0 = arith.constant 0 : i32
    return %c0_i32, %arg1 : i32, i32
  }
  func.func @transform_5(%arg0: i32, %arg1: i32) -> (i32, i32) {
    %c0_i32 = arith.constant 0 : i32
    %c0_i32_0 = arith.constant 0 : i32
    return %c0_i32, %arg1 : i32, i32
  }
  func.func @transform_6(%arg0: i32, %arg1: i32) -> (i32, i32) {
    %c0_i32 = arith.constant 0 : i32
    return %arg0, %arg1 : i32, i32
  }
}

</mosaic_0001>

<llo_original>
// kernel: tpu_custom_call.1
$region0: #{tpu_custom_call.1}
  #allocation0 [shape = 'u32[]', space=smem, size = 0x4, offset = 0x4, fixed_abs, tag = 'smem constant byte address 0x4 - core index']
  #allocation1 [shape = 'u32[144,128]{1,0:T(1,128)}', space=vmem, size = 0x12000, scoped, tag = 'internal scratch']
  #allocation2 [shape = 'f32[256,32]{1,0:T(8,128)}', space=vmem, size = 0x20000, scoped, tag = 'scratch operand']
  %s0 = inlined_call_operand.vmem [shape: f32[256,32], index: 0, kind: input, shape index: {}]
  %s1 = inlined_call_operand.vmem [shape: f32[1,32], index: 1, kind: input, shape index: {}]
  %s2 = inlined_call_operand.vmem [shape: f32[1,32], index: 2, kind: input, shape index: {}]
  %s3 = inlined_call_operand.vmem [shape: f32[1,32], index: 3, kind: input, shape index: {}]
  %s4 = inlined_call_operand.vmem [shape: f32[32,8], index: 4, kind: input, shape index: {}]
  %s5 = inlined_call_operand.vmem [shape: f32[1,8], index: 5, kind: input, shape index: {}]
  %s6 = inlined_call_operand.vmem [shape: f32[256,8], index: 6, kind: output, shape index: {}]
  %s7 = sld [smem:[#allocation0]]
  $region38: #{tpu_custom_call.1} parent=0
    _
  %s9 = ssub.s32 1, %s7
  %s10 = scalar_select 0, %s9, %s7
  // Predicated region
  $region2: #{tpu_custom_call.1} parent=0 // pred_check
    _
  $region3: #{tpu_custom_call.1} parent=0 // pred_check_branch
    %12 = sbr.rel (0) target = $region5
  $region4: #{tpu_custom_call.1} parent=0 // pred_region
    _
  $region5: #{tpu_custom_call.1} parent=0 // pred_fallthru
    _
  // Predicated region
  $region6: #{tpu_custom_call.1} parent=0 // pred_check
    _
  $region7: #{tpu_custom_call.1} parent=0 // pred_check_branch
    %14 = sbr.rel (0) target = $region9
  $region8: #{tpu_custom_call.1} parent=0 // pred_region
    _
  $region9: #{tpu_custom_call.1} parent=0 // pred_fallthru
    _
  // Predicated region
  $region10: #{tpu_custom_call.1} parent=0 // pred_check
    _
  $region11: #{tpu_custom_call.1} parent=0 // pred_check_branch
    %16 = sbr.rel (0) target = $region13
  $region12: #{tpu_custom_call.1} parent=0 // pred_region
    _
  $region13: #{tpu_custom_call.1} parent=0 // pred_fallthru
    _
  // Predicated region
  $region14: #{tpu_custom_call.1} parent=0 // pred_check
    _
  $region15: #{tpu_custom_call.1} parent=0 // pred_check_branch
    %18 = sbr.rel (0) target = $region17
  $region16: #{tpu_custom_call.1} parent=0 // pred_region
    _
  $region17: #{tpu_custom_call.1} parent=0 // pred_fallthru
    _
  // Predicated region
  $region18: #{tpu_custom_call.1} parent=0 // pred_check
    _
  $region19: #{tpu_custom_call.1} parent=0 // pred_check_branch
    %20 = sbr.rel (0) target = $region21
  $region20: #{tpu_custom_call.1} parent=0 // pred_region
    _
  $region21: #{tpu_custom_call.1} parent=0 // pred_fallthru
    _
  // Predicated region
  $region22: #{tpu_custom_call.1} parent=0 // pred_check
    _
  $region23: #{tpu_custom_call.1} parent=0 // pred_check_branch
    %22 = sbr.rel (0) target = $region25
  $region24: #{tpu_custom_call.1} parent=0 // pred_region
    _
  $region25: #{tpu_custom_call.1} parent=0 // pred_fallthru
    _
  %p23 = scmp.eq.s32.totalorder 0, 0
  // Predicated region
  $region26: #{tpu_custom_call.1} parent=0 // pred_check
    %p24 = pneg %p23
  $region27: #{tpu_custom_call.1} parent=0 // pred_check_branch
    %26 = sbr.rel (%p24) target = $region29
  $region28: #{tpu_custom_call.1} parent=0 // pred_region
    %v27 = vld [vmem:[%s0] sm:$0xff]
    %v28 = vld [vmem:[%s0 + $0x8] sm:$0xff]
    %v29 = vld [vmem:[%s0 + $0x10] sm:$0xff]
    %v30 = vld [vmem:[%s0 + $0x18] sm:$0xff]
    %v31 = vld [vmem:[%s0 + $0x20] sm:$0xff]
    %v32 = vld [vmem:[%s0 + $0x28] sm:$0xff]
    %v33 = vld [vmem:[%s0 + $0x30] sm:$0xff]
    %v34 = vld [vmem:[%s0 + $0x38] sm:$0xff]
    %v35 = vld [vmem:[%s0 + $0x40] sm:$0xff]
    %v36 = vld [vmem:[%s0 + $0x48] sm:$0xff]
    %v37 = vld [vmem:[%s0 + $0x50] sm:$0xff]
    %v38 = vld [vmem:[%s0 + $0x58] sm:$0xff]
    %v39 = vld [vmem:[%s0 + $0x60] sm:$0xff]
    %v40 = vld [vmem:[%s0 + $0x68] sm:$0xff]
    %v41 = vld [vmem:[%s0 + $0x70] sm:$0xff]
    %v42 = vld [vmem:[%s0 + $0x78] sm:$0xff]
    %v43 = vld [vmem:[%s0 + $0x80] sm:$0xff]
    %v44 = vld [vmem:[%s0 + $0x88] sm:$0xff]
    %v45 = vld [vmem:[%s0 + $0x90] sm:$0xff]
    %v46 = vld [vmem:[%s0 + $0x98] sm:$0xff]
    %v47 = vld [vmem:[%s0 + $0xa0] sm:$0xff]
    %v48 = vld [vmem:[%s0 + $0xa8] sm:$0xff]
    %v49 = vld [vmem:[%s0 + $0xb0] sm:$0xff]
    %v50 = vld [vmem:[%s0 + $0xb8] sm:$0xff]
    %v51 = vld [vmem:[%s0 + $0xc0] sm:$0xff]
    %v52 = vld [vmem:[%s0 + $0xc8] sm:$0xff]
    %v53 = vld [vmem:[%s0 + $0xd0] sm:$0xff]
    %v54 = vld [vmem:[%s0 + $0xd8] sm:$0xff]
    %v55 = vld [vmem:[%s0 + $0xe0] sm:$0xff]
    %v56 = vld [vmem:[%s0 + $0xe8] sm:$0xff]
    %v57 = vld [vmem:[%s0 + $0xf0] sm:$0xff]
    %v58 = vld [vmem:[%s0 + $0xf8] sm:$0xff]
    %v59 = vld [vmem:[%s1] sm:$0x1]
    %v61 = vlaneseq
    %v62 = vshrl.u32 %v61, 7
    %v63 = vsub.s32 0, %v62
    %v64 = vrot.slane %v59, %v63
    %v66 = vmul.f32 %v27, %v64
    %v67 = vmul.f32 %v28, %v64
    %v68 = vmul.f32 %v29, %v64
    %v69 = vmul.f32 %v30, %v64
    %v70 = vmul.f32 %v31, %v64
    %v71 = vmul.f32 %v32, %v64
    %v72 = vmul.f32 %v33, %v64
    %v73 = vmul.f32 %v34, %v64
    %v74 = vmul.f32 %v35, %v64
    %v75 = vmul.f32 %v36, %v64
    %v76 = vmul.f32 %v37, %v64
    %v77 = vmul.f32 %v38, %v64
    %v78 = vmul.f32 %v39, %v64
    %v79 = vmul.f32 %v40, %v64
    %v80 = vmul.f32 %v41, %v64
    %v81 = vmul.f32 %v42, %v64
    %v82 = vmul.f32 %v43, %v64
    %v83 = vmul.f32 %v44, %v64
    %v84 = vmul.f32 %v45, %v64
    %v85 = vmul.f32 %v46, %v64
    %v86 = vmul.f32 %v47, %v64
    %v87 = vmul.f32 %v48, %v64
    %v88 = vmul.f32 %v49, %v64
    %v89 = vmul.f32 %v50, %v64
    %v90 = vmul.f32 %v51, %v64
    %v91 = vmul.f32 %v52, %v64
    %v92 = vmul.f32 %v53, %v64
    %v93 = vmul.f32 %v54, %v64
    %v94 = vmul.f32 %v55, %v64
    %v95 = vmul.f32 %v56, %v64
    %v96 = vmul.f32 %v57, %v64
    %v97 = vmul.f32 %v58, %v64
    %vm98 = vcmask 261120
    %v99 = vsel %vm98, %v66, 0.0
    %100 = vadd.xlane.f32.xlu0 %v99
    %v101 = vpop.xlane.xlu0 %100
    %v102 = vsel %vm98, %v67, 0.0
    %103 = vadd.xlane.f32.xlu0 %v102
    %v104 = vpop.xlane.xlu0 %103
    %v105 = vsel %vm98, %v68, 0.0
    %106 = vadd.xlane.f32.xlu0 %v105
    %v107 = vpop.xlane.xlu0 %106
    %v108 = vsel %vm98, %v69, 0.0
    %109 = vadd.xlane.f32.xlu0 %v108
    %v110 = vpop.xlane.xlu0 %109
    %v111 = vsel %vm98, %v70, 0.0
    %112 = vadd.xlane.f32.xlu0 %v111
    %v113 = vpop.xlane.xlu0 %112
    %v114 = vsel %vm98, %v71, 0.0
    %115 = vadd.xlane.f32.xlu0 %v114
    %v116 = vpop.xlane.xlu0 %115
    %v117 = vsel %vm98, %v72, 0.0
    %118 = vadd.xlane.f32.xlu0 %v117
    %v119 = vpop.xlane.xlu0 %118
    %v120 = vsel %vm98, %v73, 0.0
    %121 = vadd.xlane.f32.xlu0 %v120
    %v122 = vpop.xlane.xlu0 %121
    %v123 = vsel %vm98, %v74, 0.0
    %124 = vadd.xlane.f32.xlu0 %v123
    %v125 = vpop.xlane.xlu0 %124
    %v126 = vsel %vm98, %v75, 0.0
    %127 = vadd.xlane.f32.xlu0 %v126
    %v128 = vpop.xlane.xlu0 %127
    %v129 = vsel %vm98, %v76, 0.0
    %130 = vadd.xlane.f32.xlu0 %v129
    %v131 = vpop.xlane.xlu0 %130
    %v132 = vsel %vm98, %v77, 0.0
    %133 = vadd.xlane.f32.xlu0 %v132
    %v134 = vpop.xlane.xlu0 %133
    %v135 = vsel %vm98, %v78, 0.0
    %136 = vadd.xlane.f32.xlu0 %v135
    %v137 = vpop.xlane.xlu0 %136
    %v138 = vsel %vm98, %v79, 0.0
    %139 = vadd.xlane.f32.xlu0 %v138
    %v140 = vpop.xlane.xlu0 %139
    %v141 = vsel %vm98, %v80, 0.0
    %142 = vadd.xlane.f32.xlu0 %v141
    %v143 = vpop.xlane.xlu0 %142
    %v144 = vsel %vm98, %v81, 0.0
    %145 = vadd.xlane.f32.xlu0 %v144
    %v146 = vpop.xlane.xlu0 %145
    %v147 = vsel %vm98, %v82, 0.0
    %148 = vadd.xlane.f32.xlu0 %v147
    %v149 = vpop.xlane.xlu0 %148
    %v150 = vsel %vm98, %v83, 0.0
    %151 = vadd.xlane.f32.xlu0 %v150
    %v152 = vpop.xlane.xlu0 %151
    %v153 = vsel %vm98, %v84, 0.0
    %154 = vadd.xlane.f32.xlu0 %v153
    %v155 = vpop.xlane.xlu0 %154
    %v156 = vsel %vm98, %v85, 0.0
    %157 = vadd.xlane.f32.xlu0 %v156
    %v158 = vpop.xlane.xlu0 %157
    %v159 = vsel %vm98, %v86, 0.0
    %160 = vadd.xlane.f32.xlu0 %v159
    %v161 = vpop.xlane.xlu0 %160
    %v162 = vsel %vm98, %v87, 0.0
    %163 = vadd.xlane.f32.xlu0 %v162
    %v164 = vpop.xlane.xlu0 %163
    %v165 = vsel %vm98, %v88, 0.0
    %166 = vadd.xlane.f32.xlu0 %v165
    %v167 = vpop.xlane.xlu0 %166
    %v168 = vsel %vm98, %v89, 0.0
    %169 = vadd.xlane.f32.xlu0 %v168
    %v170 = vpop.xlane.xlu0 %169
    %v171 = vsel %vm98, %v90, 0.0
    %172 = vadd.xlane.f32.xlu0 %v171
    %v173 = vpop.xlane.xlu0 %172
    %v174 = vsel %vm98, %v91, 0.0
    %175 = vadd.xlane.f32.xlu0 %v174
    %v176 = vpop.xlane.xlu0 %175
    %v177 = vsel %vm98, %v92, 0.0
    %178 = vadd.xlane.f32.xlu0 %v177
    %v179 = vpop.xlane.xlu0 %178
    %v180 = vsel %vm98, %v93, 0.0
    %181 = vadd.xlane.f32.xlu0 %v180
    %v182 = vpop.xlane.xlu0 %181
    %v183 = vsel %vm98, %v94, 0.0
    %184 = vadd.xlane.f32.xlu0 %v183
    %v185 = vpop.xlane.xlu0 %184
    %v186 = vsel %vm98, %v95, 0.0
    %187 = vadd.xlane.f32.xlu0 %v186
    %v188 = vpop.xlane.xlu0 %187
    %v189 = vsel %vm98, %v96, 0.0
    %190 = vadd.xlane.f32.xlu0 %v189
    %v191 = vpop.xlane.xlu0 %190
    %v192 = vsel %vm98, %v97, 0.0
    %193 = vadd.xlane.f32.xlu0 %v192
    %v194 = vpop.xlane.xlu0 %193
    %v195 = vrcp.pop 32.0
    %v196 = vmul.f32 %v101, %v195
    %v197 = vmul.f32 %v104, %v195
    %v198 = vmul.f32 %v107, %v195
    %v199 = vmul.f32 %v110, %v195
    %v200 = vmul.f32 %v113, %v195
    %v201 = vmul.f32 %v116, %v195
    %v202 = vmul.f32 %v119, %v195
    %v203 = vmul.f32 %v122, %v195
    %v204 = vmul.f32 %v125, %v195
    %v205 = vmul.f32 %v128, %v195
    %v206 = vmul.f32 %v131, %v195
    %v207 = vmul.f32 %v134, %v195
    %v208 = vmul.f32 %v137, %v195
    %v209 = vmul.f32 %v140, %v195
    %v210 = vmul.f32 %v143, %v195
    %v211 = vmul.f32 %v146, %v195
    %v212 = vmul.f32 %v149, %v195
    %v213 = vmul.f32 %v152, %v195
    %v214 = vmul.f32 %v155, %v195
    %v215 = vmul.f32 %v158, %v195
    %v216 = vmul.f32 %v161, %v195
    %v217 = vmul.f32 %v164, %v195
    %v218 = vmul.f32 %v167, %v195
    %v219 = vmul.f32 %v170, %v195
    %v220 = vmul.f32 %v173, %v195
    %v221 = vmul.f32 %v176, %v195
    %v222 = vmul.f32 %v179, %v195
    %v223 = vmul.f32 %v182, %v195
    %v224 = vmul.f32 %v185, %v195
    %v225 = vmul.f32 %v188, %v195
    %v226 = vmul.f32 %v191, %v195
    %v227 = vmul.f32 %v194, %v195
    %v228 = vsub.f32 %v66, %v196
    %v229 = vsub.f32 %v67, %v197
    %v230 = vsub.f32 %v68, %v198
    %v231 = vsub.f32 %v69, %v199
    %v232 = vsub.f32 %v70, %v200
    %v233 = vsub.f32 %v71, %v201
    %v234 = vsub.f32 %v72, %v202
    %v235 = vsub.f32 %v73, %v203
    %v236 = vsub.f32 %v74, %v204
    %v237 = vsub.f32 %v75, %v205
    %v238 = vsub.f32 %v76, %v206
    %v239 = vsub.f32 %v77, %v207
    %v240 = vsub.f32 %v78, %v208
    %v241 = vsub.f32 %v79, %v209
    %v242 = vsub.f32 %v80, %v210
    %v243 = vsub.f32 %v81, %v211
    %v244 = vsub.f32 %v82, %v212
    %v245 = vsub.f32 %v83, %v213
    %v246 = vsub.f32 %v84, %v214
    %v247 = vsub.f32 %v85, %v215
    %v248 = vsub.f32 %v86, %v216
    %v249 = vsub.f32 %v87, %v217
    %v250 = vsub.f32 %v88, %v218
    %v251 = vsub.f32 %v89, %v219
    %v252 = vsub.f32 %v90, %v220
    %v253 = vsub.f32 %v91, %v221
    %v254 = vsub.f32 %v92, %v222
    %v255 = vsub.f32 %v93, %v223
    %v256 = vsub.f32 %v94, %v224
    %v257 = vsub.f32 %v95, %v225
    %v258 = vsub.f32 %v96, %v226
    %v259 = vsub.f32 %v97, %v227
    %v260 = vmul.f32 %v228, %v228
    %v261 = vmul.f32 %v229, %v229
    %v262 = vmul.f32 %v230, %v230
    %v263 = vmul.f32 %v231, %v231
    %v264 = vmul.f32 %v232, %v232
    %v265 = vmul.f32 %v233, %v233
    %v266 = vmul.f32 %v234, %v234
    %v267 = vmul.f32 %v235, %v235
    %v268 = vmul.f32 %v236, %v236
    %v269 = vmul.f32 %v237, %v237
    %v270 = vmul.f32 %v238, %v238
    %v271 = vmul.f32 %v239, %v239
    %v272 = vmul.f32 %v240, %v240
    %v273 = vmul.f32 %v241, %v241
    %v274 = vmul.f32 %v242, %v242
    %v275 = vmul.f32 %v243, %v243
    %v276 = vmul.f32 %v244, %v244
    %v277 = vmul.f32 %v245, %v245
    %v278 = vmul.f32 %v246, %v246
    %v279 = vmul.f32 %v247, %v247
    %v280 = vmul.f32 %v248, %v248
    %v281 = vmul.f32 %v249, %v249
    %v282 = vmul.f32 %v250, %v250
    %v283 = vmul.f32 %v251, %v251
    %v284 = vmul.f32 %v252, %v252
    %v285 = vmul.f32 %v253, %v253
    %v286 = vmul.f32 %v254, %v254
    %v287 = vmul.f32 %v255, %v255
    %v288 = vmul.f32 %v256, %v256
    %v289 = vmul.f32 %v257, %v257
    %v290 = vmul.f32 %v258, %v258
    %v291 = vmul.f32 %v259, %v259
    %v292 = vsel %vm98, %v260, 0.0
    %293 = vadd.xlane.f32.xlu0 %v292
    %v294 = vpop.xlane.xlu0 %293
    %v295 = vsel %vm98, %v261, 0.0
    %296 = vadd.xlane.f32.xlu0 %v295
    %v297 = vpop.xlane.xlu0 %296
    %v298 = vsel %vm98, %v262, 0.0
    %299 = vadd.xlane.f32.xlu0 %v298
    %v300 = vpop.xlane.xlu0 %299
    %v301 = vsel %vm98, %v263, 0.0
    %302 = vadd.xlane.f32.xlu0 %v301
    %v303 = vpop.xlane.xlu0 %302
    %v304 = vsel %vm98, %v264, 0.0
    %305 = vadd.xlane.f32.xlu0 %v304
    %v306 = vpop.xlane.xlu0 %305
    %v307 = vsel %vm98, %v265, 0.0
    %308 = vadd.xlane.f32.xlu0 %v307
    %v309 = vpop.xlane.xlu0 %308
    %v310 = vsel %vm98, %v266, 0.0
    %311 = vadd.xlane.f32.xlu0 %v310
    %v312 = vpop.xlane.xlu0 %311
    %v313 = vsel %vm98, %v267, 0.0
    %314 = vadd.xlane.f32.xlu0 %v313
    %v315 = vpop.xlane.xlu0 %314
    %v316 = vsel %vm98, %v268, 0.0
    %317 = vadd.xlane.f32.xlu0 %v316
    %v318 = vpop.xlane.xlu0 %317
    %v319 = vsel %vm98, %v269, 0.0
    %320 = vadd.xlane.f32.xlu0 %v319
    %v321 = vpop.xlane.xlu0 %320
    %v322 = vsel %vm98, %v270, 0.0
    %323 = vadd.xlane.f32.xlu0 %v322
    %v324 = vpop.xlane.xlu0 %323
    %v325 = vsel %vm98, %v271, 0.0
    %326 = vadd.xlane.f32.xlu0 %v325
    %v327 = vpop.xlane.xlu0 %326
    %v328 = vsel %vm98, %v272, 0.0
    %329 = vadd.xlane.f32.xlu0 %v328
    %v330 = vpop.xlane.xlu0 %329
    %v331 = vsel %vm98, %v273, 0.0
    %332 = vadd.xlane.f32.xlu0 %v331
    %v333 = vpop.xlane.xlu0 %332
    %v334 = vsel %vm98, %v274, 0.0
    %335 = vadd.xlane.f32.xlu0 %v334
    %v336 = vpop.xlane.xlu0 %335
    %v337 = vsel %vm98, %v275, 0.0
    %338 = vadd.xlane.f32.xlu0 %v337
    %v339 = vpop.xlane.xlu0 %338
    %v340 = vsel %vm98, %v276, 0.0
    %341 = vadd.xlane.f32.xlu0 %v340
    %v342 = vpop.xlane.xlu0 %341
    %v343 = vsel %vm98, %v277, 0.0
    %344 = vadd.xlane.f32.xlu0 %v343
    %v345 = vpop.xlane.xlu0 %344
    %v346 = vsel %vm98, %v278, 0.0
    %347 = vadd.xlane.f32.xlu0 %v346
    %v348 = vpop.xlane.xlu0 %347
    %v349 = vsel %vm98, %v279, 0.0
    %350 = vadd.xlane.f32.xlu0 %v349
    %v351 = vpop.xlane.xlu0 %350
    %v352 = vsel %vm98, %v280, 0.0
    %353 = vadd.xlane.f32.xlu0 %v352
    %v354 = vpop.xlane.xlu0 %353
    %v355 = vsel %vm98, %v281, 0.0
    %356 = vadd.xlane.f32.xlu0 %v355
    %v357 = vpop.xlane.xlu0 %356
    %v358 = vsel %vm98, %v282, 0.0
    %359 = vadd.xlane.f32.xlu0 %v358
    %v360 = vpop.xlane.xlu0 %359
    %v361 = vsel %vm98, %v283, 0.0
    %362 = vadd.xlane.f32.xlu0 %v361
    %v363 = vpop.xlane.xlu0 %362
    %v364 = vsel %vm98, %v284, 0.0
    %365 = vadd.xlane.f32.xlu0 %v364
    %v366 = vpop.xlane.xlu0 %365
    %v367 = vsel %vm98, %v285, 0.0
    %368 = vadd.xlane.f32.xlu0 %v367
    %v369 = vpop.xlane.xlu0 %368
    %v370 = vsel %vm98, %v286, 0.0
    %371 = vadd.xlane.f32.xlu0 %v370
    %v372 = vpop.xlane.xlu0 %371
    %v373 = vsel %vm98, %v287, 0.0
    %374 = vadd.xlane.f32.xlu0 %v373
    %v375 = vpop.xlane.xlu0 %374
    %v376 = vsel %vm98, %v288, 0.0
    %377 = vadd.xlane.f32.xlu0 %v376
    %v378 = vpop.xlane.xlu0 %377
    %v379 = vsel %vm98, %v289, 0.0
    %380 = vadd.xlane.f32.xlu0 %v379
    %v381 = vpop.xlane.xlu0 %380
    %v382 = vsel %vm98, %v290, 0.0
    %383 = vadd.xlane.f32.xlu0 %v382
    %v384 = vpop.xlane.xlu0 %383
    %v385 = vsel %vm98, %v291, 0.0
    %386 = vadd.xlane.f32.xlu0 %v385
    %v387 = vpop.xlane.xlu0 %386
    %v388 = vmul.f32 %v294, %v195
    %v389 = vmul.f32 %v297, %v195
    %v390 = vmul.f32 %v300, %v195
    %v391 = vmul.f32 %v303, %v195
    %v392 = vmul.f32 %v306, %v195
    %v393 = vmul.f32 %v309, %v195
    %v394 = vmul.f32 %v312, %v195
    %v395 = vmul.f32 %v315, %v195
    %v396 = vmul.f32 %v318, %v195
    %v397 = vmul.f32 %v321, %v195
    %v398 = vmul.f32 %v324, %v195
    %v399 = vmul.f32 %v327, %v195
    %v400 = vmul.f32 %v330, %v195
    %v401 = vmul.f32 %v333, %v195
    %v402 = vmul.f32 %v336, %v195
    %v403 = vmul.f32 %v339, %v195
    %v404 = vmul.f32 %v342, %v195
    %v405 = vmul.f32 %v345, %v195
    %v406 = vmul.f32 %v348, %v195
    %v407 = vmul.f32 %v351, %v195
    %v408 = vmul.f32 %v354, %v195
    %v409 = vmul.f32 %v357, %v195
    %v410 = vmul.f32 %v360, %v195
    %v411 = vmul.f32 %v363, %v195
    %v412 = vmul.f32 %v366, %v195
    %v413 = vmul.f32 %v369, %v195
    %v414 = vmul.f32 %v372, %v195
    %v415 = vmul.f32 %v375, %v195
    %v416 = vmul.f32 %v378, %v195
    %v417 = vmul.f32 %v381, %v195
    %v418 = vmul.f32 %v384, %v195
    %v419 = vmul.f32 %v387, %v195
    %v420 = vadd.f32 %v388, 1e-05
    %v421 = vadd.f32 %v389, 1e-05
    %v422 = vadd.f32 %v390, 1e-05
    %v423 = vadd.f32 %v391, 1e-05
    %v424 = vadd.f32 %v392, 1e-05
    %v425 = vadd.f32 %v393, 1e-05
    %v426 = vadd.f32 %v394, 1e-05
    %v427 = vadd.f32 %v395, 1e-05
    %v428 = vadd.f32 %v396, 1e-05
    %v429 = vadd.f32 %v397, 1e-05
    %v430 = vadd.f32 %v398, 1e-05
    %v431 = vadd.f32 %v399, 1e-05
    %v432 = vadd.f32 %v400, 1e-05
    %v433 = vadd.f32 %v401, 1e-05
    %v434 = vadd.f32 %v402, 1e-05
    %v435 = vadd.f32 %v403, 1e-05
    %v436 = vadd.f32 %v404, 1e-05
    %v437 = vadd.f32 %v405, 1e-05
    %v438 = vadd.f32 %v406, 1e-05
    %v439 = vadd.f32 %v407, 1e-05
    %v440 = vadd.f32 %v408, 1e-05
    %v441 = vadd.f32 %v409, 1e-05
    %v442 = vadd.f32 %v410, 1e-05
    %v443 = vadd.f32 %v411, 1e-05
    %v444 = vadd.f32 %v412, 1e-05
    %v445 = vadd.f32 %v413, 1e-05
    %v446 = vadd.f32 %v414, 1e-05
    %v447 = vadd.f32 %v415, 1e-05
    %v448 = vadd.f32 %v416, 1e-05
    %v449 = vadd.f32 %v417, 1e-05
    %v450 = vadd.f32 %v418, 1e-05
    %v451 = vadd.f32 %v419, 1e-05
    %v452 = vrsqrt.pop %v420
    %v453 = vrsqrt.pop %v421
    %v454 = vrsqrt.pop %v422
    %v455 = vrsqrt.pop %v423
    %v456 = vrsqrt.pop %v424
    %v457 = vrsqrt.pop %v425
    %v458 = vrsqrt.pop %v426
    %v459 = vrsqrt.pop %v427
    %v460 = vrsqrt.pop %v428
    %v461 = vrsqrt.pop %v429
    %v462 = vrsqrt.pop %v430
    %v463 = vrsqrt.pop %v431
    %v464 = vrsqrt.pop %v432
    %v465 = vrsqrt.pop %v433
    %v466 = vrsqrt.pop %v434
    %v467 = vrsqrt.pop %v435
    %v468 = vrsqrt.pop %v436
    %v469 = vrsqrt.pop %v437
    %v470 = vrsqrt.pop %v438
    %v471 = vrsqrt.pop %v439
    %v472 = vrsqrt.pop %v440
    %v473 = vrsqrt.pop %v441
    %v474 = vrsqrt.pop %v442
    %v475 = vrsqrt.pop %v443
    %v476 = vrsqrt.pop %v444
    %v477 = vrsqrt.pop %v445
    %v478 = vrsqrt.pop %v446
    %v479 = vrsqrt.pop %v447
    %v480 = vrsqrt.pop %v448
    %v481 = vrsqrt.pop %v449
    %v482 = vrsqrt.pop %v450
    %v483 = vrsqrt.pop %v451
    %v484 = vmul.f32 %v228, %v452
    %v485 = vmul.f32 %v229, %v453
    %v486 = vmul.f32 %v230, %v454
    %v487 = vmul.f32 %v231, %v455
    %v488 = vmul.f32 %v232, %v456
    %v489 = vmul.f32 %v233, %v457
    %v490 = vmul.f32 %v234, %v458
    %v491 = vmul.f32 %v235, %v459
    %v492 = vmul.f32 %v236, %v460
    %v493 = vmul.f32 %v237, %v461
    %v494 = vmul.f32 %v238, %v462
    %v495 = vmul.f32 %v239, %v463
    %v496 = vmul.f32 %v240, %v464
    %v497 = vmul.f32 %v241, %v465
    %v498 = vmul.f32 %v242, %v466
    %v499 = vmul.f32 %v243, %v467
    %v500 = vmul.f32 %v244, %v468
    %v501 = vmul.f32 %v245, %v469
    %v502 = vmul.f32 %v246, %v470
    %v503 = vmul.f32 %v247, %v471
    %v504 = vmul.f32 %v248, %v472
    %v505 = vmul.f32 %v249, %v473
    %v506 = vmul.f32 %v250, %v474
    %v507 = vmul.f32 %v251, %v475
    %v508 = vmul.f32 %v252, %v476
    %v509 = vmul.f32 %v253, %v477
    %v510 = vmul.f32 %v254, %v478
    %v511 = vmul.f32 %v255, %v479
    %v512 = vmul.f32 %v256, %v480
    %v513 = vmul.f32 %v257, %v481
    %v514 = vmul.f32 %v258, %v482
    %v515 = vmul.f32 %v259, %v483
    %v516 = vld [vmem:[%s2] sm:$0x1]
    %v518 = vlaneseq
    %v519 = vshrl.u32 %v518, 7
    %v520 = vsub.s32 0, %v519
    %v521 = vrot.slane %v516, %v520
    %v523 = vmul.f32 %v484, %v521
    %v524 = vmul.f32 %v485, %v521
    %v525 = vmul.f32 %v486, %v521
    %v526 = vmul.f32 %v487, %v521
    %v527 = vmul.f32 %v488, %v521
    %v528 = vmul.f32 %v489, %v521
    %v529 = vmul.f32 %v490, %v521
    %v530 = vmul.f32 %v491, %v521
    %v531 = vmul.f32 %v492, %v521
    %v532 = vmul.f32 %v493, %v521
    %v533 = vmul.f32 %v494, %v521
    %v534 = vmul.f32 %v495, %v521
    %v535 = vmul.f32 %v496, %v521
    %v536 = vmul.f32 %v497, %v521
    %v537 = vmul.f32 %v498, %v521
    %v538 = vmul.f32 %v499, %v521
    %v539 = vmul.f32 %v500, %v521
    %v540 = vmul.f32 %v501, %v521
    %v541 = vmul.f32 %v502, %v521
    %v542 = vmul.f32 %v503, %v521
    %v543 = vmul.f32 %v504, %v521
    %v544 = vmul.f32 %v505, %v521
    %v545 = vmul.f32 %v506, %v521
    %v546 = vmul.f32 %v507, %v521
    %v547 = vmul.f32 %v508, %v521
    %v548 = vmul.f32 %v509, %v521
    %v549 = vmul.f32 %v510, %v521
    %v550 = vmul.f32 %v511, %v521
    %v551 = vmul.f32 %v512, %v521
    %v552 = vmul.f32 %v513, %v521
    %v553 = vmul.f32 %v514, %v521
    %v554 = vmul.f32 %v515, %v521
    %v555 = vld [vmem:[%s3] sm:$0x1]
    %v557 = vlaneseq
    %v558 = vshrl.u32 %v557, 7
    %v559 = vsub.s32 0, %v558
    %v560 = vrot.slane %v555, %v559
    %v562 = vadd.f32 %v523, %v560
    %v563 = vadd.f32 %v524, %v560
    %v564 = vadd.f32 %v525, %v560
    %v565 = vadd.f32 %v526, %v560
    %v566 = vadd.f32 %v527, %v560
    %v567 = vadd.f32 %v528, %v560
    %v568 = vadd.f32 %v529, %v560
    %v569 = vadd.f32 %v530, %v560
    %v570 = vadd.f32 %v531, %v560
    %v571 = vadd.f32 %v532, %v560
    %v572 = vadd.f32 %v533, %v560
    %v573 = vadd.f32 %v534, %v560
    %v574 = vadd.f32 %v535, %v560
    %v575 = vadd.f32 %v536, %v560
    %v576 = vadd.f32 %v537, %v560
    %v577 = vadd.f32 %v538, %v560
    %v578 = vadd.f32 %v539, %v560
    %v579 = vadd.f32 %v540, %v560
    %v580 = vadd.f32 %v541, %v560
    %v581 = vadd.f32 %v542, %v560
    %v582 = vadd.f32 %v543, %v560
    %v583 = vadd.f32 %v544, %v560
    %v584 = vadd.f32 %v545, %v560
    %v585 = vadd.f32 %v546, %v560
    %v586 = vadd.f32 %v547, %v560
    %v587 = vadd.f32 %v548, %v560
    %v588 = vadd.f32 %v549, %v560
    %v589 = vadd.f32 %v550, %v560
    %v590 = vadd.f32 %v551, %v560
    %v591 = vadd.f32 %v552, %v560
    %v592 = vadd.f32 %v553, %v560
    %v593 = vadd.f32 %v554, %v560
    %v594 = vmax.f32 %v562, 0.0
    %v595 = vmax.f32 %v563, 0.0
    %v596 = vmax.f32 %v564, 0.0
    %v597 = vmax.f32 %v565, 0.0
    %v598 = vmax.f32 %v566, 0.0
    %v599 = vmax.f32 %v567, 0.0
    %v600 = vmax.f32 %v568, 0.0
    %v601 = vmax.f32 %v569, 0.0
    %v602 = vmax.f32 %v570, 0.0
    %v603 = vmax.f32 %v571, 0.0
    %v604 = vmax.f32 %v572, 0.0
    %v605 = vmax.f32 %v573, 0.0
    %v606 = vmax.f32 %v574, 0.0
    %v607 = vmax.f32 %v575, 0.0
    %v608 = vmax.f32 %v576, 0.0
    %v609 = vmax.f32 %v577, 0.0
    %v610 = vmax.f32 %v578, 0.0
    %v611 = vmax.f32 %v579, 0.0
    %v612 = vmax.f32 %v580, 0.0
    %v613 = vmax.f32 %v581, 0.0
    %v614 = vmax.f32 %v582, 0.0
    %v615 = vmax.f32 %v583, 0.0
    %v616 = vmax.f32 %v584, 0.0
    %v617 = vmax.f32 %v585, 0.0
    %v618 = vmax.f32 %v586, 0.0
    %v619 = vmax.f32 %v587, 0.0
    %v620 = vmax.f32 %v588, 0.0
    %v621 = vmax.f32 %v589, 0.0
    %v622 = vmax.f32 %v590, 0.0
    %v623 = vmax.f32 %v591, 0.0
    %v624 = vmax.f32 %v592, 0.0
    %v625 = vmax.f32 %v593, 0.0
    %626 = vst.msk [vmem:[#allocation2] sm:$0xff] %vm98, %v594
    %627 = vst.msk [vmem:[#allocation2 + $0x8] sm:$0xff] %vm98, %v595
    %628 = vst.msk [vmem:[#allocation2 + $0x10] sm:$0xff] %vm98, %v596
    %629 = vst.msk [vmem:[#allocation2 + $0x18] sm:$0xff] %vm98, %v597
    %630 = vst.msk [vmem:[#allocation2 + $0x20] sm:$0xff] %vm98, %v598
    %631 = vst.msk [vmem:[#allocation2 + $0x28] sm:$0xff] %vm98, %v599
    %632 = vst.msk [vmem:[#allocation2 + $0x30] sm:$0xff] %vm98, %v600
    %633 = vst.msk [vmem:[#allocation2 + $0x38] sm:$0xff] %vm98, %v601
    %634 = vst.msk [vmem:[#allocation2 + $0x40] sm:$0xff] %vm98, %v602
    %635 = vst.msk [vmem:[#allocation2 + $0x48] sm:$0xff] %vm98, %v603
    %636 = vst.msk [vmem:[#allocation2 + $0x50] sm:$0xff] %vm98, %v604
    %637 = vst.msk [vmem:[#allocation2 + $0x58] sm:$0xff] %vm98, %v605
    %638 = vst.msk [vmem:[#allocation2 + $0x60] sm:$0xff] %vm98, %v606
    %639 = vst.msk [vmem:[#allocation2 + $0x68] sm:$0xff] %vm98, %v607
    %640 = vst.msk [vmem:[#allocation2 + $0x70] sm:$0xff] %vm98, %v608
    %641 = vst.msk [vmem:[#allocation2 + $0x78] sm:$0xff] %vm98, %v609
    %642 = vst.msk [vmem:[#allocation2 + $0x80] sm:$0xff] %vm98, %v610
    %643 = vst.msk [vmem:[#allocation2 + $0x88] sm:$0xff] %vm98, %v611
    %644 = vst.msk [vmem:[#allocation2 + $0x90] sm:$0xff] %vm98, %v612
    %645 = vst.msk [vmem:[#allocation2 + $0x98] sm:$0xff] %vm98, %v613
    %646 = vst.msk [vmem:[#allocation2 + $0xa0] sm:$0xff] %vm98, %v614
    %647 = vst.msk [vmem:[#allocation2 + $0xa8] sm:$0xff] %vm98, %v615
    %648 = vst.msk [vmem:[#allocation2 + $0xb0] sm:$0xff] %vm98, %v616
    %649 = vst.msk [vmem:[#allocation2 + $0xb8] sm:$0xff] %vm98, %v617
    %650 = vst.msk [vmem:[#allocation2 + $0xc0] sm:$0xff] %vm98, %v618
    %651 = vst.msk [vmem:[#allocation2 + $0xc8] sm:$0xff] %vm98, %v619
    %652 = vst.msk [vmem:[#allocation2 + $0xd0] sm:$0xff] %vm98, %v620
    %653 = vst.msk [vmem:[#allocation2 + $0xd8] sm:$0xff] %vm98, %v621
    %654 = vst.msk [vmem:[#allocation2 + $0xe0] sm:$0xff] %vm98, %v622
    %655 = vst.msk [vmem:[#allocation2 + $0xe8] sm:$0xff] %vm98, %v623
    %656 = vst.msk [vmem:[#allocation2 + $0xf0] sm:$0xff] %vm98, %v624
    %657 = vst.msk [vmem:[#allocation2 + $0xf8] sm:$0xff] %vm98, %v625
  $region29: #{tpu_custom_call.1} parent=0 // pred_fallthru
    _
  %v658 = vld [vmem:[#allocation2] sm:$0xff]
  %v659 = vld [vmem:[#allocation2 + $0x8] sm:$0xff]
  %v660 = vld [vmem:[#allocation2 + $0x10] sm:$0xff]
  %v661 = vld [vmem:[#allocation2 + $0x18] sm:$0xff]
  %v662 = vld [vmem:[#allocation2 + $0x20] sm:$0xff]
  %v663 = vld [vmem:[#allocation2 + $0x28] sm:$0xff]
  %v664 = vld [vmem:[#allocation2 + $0x30] sm:$0xff]
  %v665 = vld [vmem:[#allocation2 + $0x38] sm:$0xff]
  %v666 = vld [vmem:[#allocation2 + $0x40] sm:$0xff]
  %v667 = vld [vmem:[#allocation2 + $0x48] sm:$0xff]
  %v668 = vld [vmem:[#allocation2 + $0x50] sm:$0xff]
  %v669 = vld [vmem:[#allocation2 + $0x58] sm:$0xff]
  %v670 = vld [vmem:[#allocation2 + $0x60] sm:$0xff]
  %v671 = vld [vmem:[#allocation2 + $0x68] sm:$0xff]
  %v672 = vld [vmem:[#allocation2 + $0x70] sm:$0xff]
  %v673 = vld [vmem:[#allocation2 + $0x78] sm:$0xff]
  %v674 = vld [vmem:[#allocation2 + $0x80] sm:$0xff]
  %v675 = vld [vmem:[#allocation2 + $0x88] sm:$0xff]
  %v676 = vld [vmem:[#allocation2 + $0x90] sm:$0xff]
  %v677 = vld [vmem:[#allocation2 + $0x98] sm:$0xff]
  %v678 = vld [vmem:[#allocation2 + $0xa0] sm:$0xff]
  %v679 = vld [vmem:[#allocation2 + $0xa8] sm:$0xff]
  %v680 = vld [vmem:[#allocation2 + $0xb0] sm:$0xff]
  %v681 = vld [vmem:[#allocation2 + $0xb8] sm:$0xff]
  %v682 = vld [vmem:[#allocation2 + $0xc0] sm:$0xff]
  %v683 = vld [vmem:[#allocation2 + $0xc8] sm:$0xff]
  %v684 = vld [vmem:[#allocation2 + $0xd0] sm:$0xff]
  %v685 = vld [vmem:[#allocation2 + $0xd8] sm:$0xff]
  %v686 = vld [vmem:[#allocation2 + $0xe0] sm:$0xff]
  %v687 = vld [vmem:[#allocation2 + $0xe8] sm:$0xff]
  %v688 = vld [vmem:[#allocation2 + $0xf0] sm:$0xff]
  %v689 = vld [vmem:[#allocation2 + $0xf8] sm:$0xff]
  %v690 = vld [vmem:[%s4] sm:$0xff]
  %v691 = vld [vmem:[%s4 + $0x8] sm:$0xff]
  %v692 = vld [vmem:[%s4 + $0x10] sm:$0xff]
  %v693 = vld [vmem:[%s4 + $0x18] sm:$0xff]
  %v694 = vld [vmem:[%s5] sm:$0x1]
  %v696 = vlaneseq
  %v697 = vshrl.u32 %v696, 7
  %v698 = vsub.s32 0, %v697
  %v699 = vrot.slane %v694, %v698
  %vm701 = vcmask 261120
  %v703 = vsel %vm701, %v658, 0
  %v706 = vsel %vm701, %v659, 0
  %v709 = vsel %vm701, %v660, 0
  %v712 = vsel %vm701, %v661, 0
  %v715 = vsel %vm701, %v662, 0
  %v718 = vsel %vm701, %v663, 0
  %v721 = vsel %vm701, %v664, 0
  %v724 = vsel %vm701, %v665, 0
  %v727 = vsel %vm701, %v666, 0
  %v730 = vsel %vm701, %v667, 0
  %v733 = vsel %vm701, %v668, 0
  %v736 = vsel %vm701, %v669, 0
  %v739 = vsel %vm701, %v670, 0
  %v742 = vsel %vm701, %v671, 0
  %v745 = vsel %vm701, %v672, 0
  %v748 = vsel %vm701, %v673, 0
  %v751 = vsel %vm701, %v674, 0
  %v754 = vsel %vm701, %v675, 0
  %v757 = vsel %vm701, %v676, 0
  %v760 = vsel %vm701, %v677, 0
  %v763 = vsel %vm701, %v678, 0
  %v766 = vsel %vm701, %v679, 0
  %v769 = vsel %vm701, %v680, 0
  %v772 = vsel %vm701, %v681, 0
  %v775 = vsel %vm701, %v682, 0
  %v778 = vsel %vm701, %v683, 0
  %v781 = vsel %vm701, %v684, 0
  %v784 = vsel %vm701, %v685, 0
  %v787 = vsel %vm701, %v686, 0
  %v790 = vsel %vm701, %v687, 0
  %v793 = vsel %vm701, %v688, 0
  %v796 = vsel %vm701, %v689, 0
  %798 = vmatprep.subr.mxu0 0.0
  %799 = vmatpush1.msra.mxu0 0.0
  %800 = vmatprep.subr.mxu0 0.0
  %801 = vmatpush1.msra.mxu0 0.0
  %802 = vmatprep.subr.mxu0 0.0
  %803 = vmatpush1.msra.mxu0 0.0
  %804 = vmatprep.subr.mxu0 0.0
  %805 = vmatpush1.msra.mxu0 0.0
  %806 = vmatprep.subr.mxu0 0.0
  %807 = vmatpush1.msra.mxu0 0.0
  %808 = vmatprep.subr.mxu0 0.0
  %809 = vmatpush1.msra.mxu0 0.0
  %810 = vmatprep.subr.mxu0 0.0
  %811 = vmatpush1.msra.mxu0 0.0
  %812 = vmatprep.subr.mxu0 0.0
  %813 = vmatpush1.msra.mxu0 0.0
  %814 = vmatprep.subr.mxu0 0.0
  %815 = vmatpush1.msra.mxu0 0.0
  %816 = vmatprep.subr.mxu0 0.0
  %817 = vmatpush1.msra.mxu0 0.0
  %818 = vmatprep.subr.mxu0 0.0
  %819 = vmatpush1.msra.mxu0 0.0
  %820 = vmatprep.subr.mxu0 0.0
  %821 = vmatpush1.msra.mxu0 0.0
  %822 = vmatprep.subr.mxu0 0.0
  %823 = vmatpush1.msra.mxu0 %v693
  %824 = vmatprep.subr.mxu0 0.0
  %825 = vmatpush1.msra.mxu0 %v692
  %826 = vmatprep.subr.mxu0 0.0
  %827 = vmatpush1.msra.mxu0 %v691
  %828 = vmatprep.subr.mxu0 0.0
  %829 = vmatpush1.msra.mxu0 %v690
  %830 = vmatprep.subr.mxu0 0.0
  %831 = vmatpush2.msra.mxu0 0.0
  %832 = vmatprep.subr.mxu0 0.0
  %833 = vmatpush2.msra.mxu0 0.0
  %834 = vmatprep.subr.mxu0 0.0
  %835 = vmatpush2.msra.mxu0 0.0
  %836 = vmatprep.subr.mxu0 0.0
  %837 = vmatpush2.msra.mxu0 0.0
  %838 = vmatprep.subr.mxu0 0.0
  %839 = vmatpush2.msra.mxu0 0.0
  %840 = vmatprep.subr.mxu0 0.0
  %841 = vmatpush2.msra.mxu0 0.0
  %842 = vmatprep.subr.mxu0 0.0
  %843 = vmatpush2.msra.mxu0 0.0
  %844 = vmatprep.subr.mxu0 0.0
  %845 = vmatpush2.msra.mxu0 0.0
  %846 = vmatprep.subr.mxu0 0.0
  %847 = vmatpush2.msra.mxu0 0.0
  %848 = vmatprep.subr.mxu0 0.0
  %849 = vmatpush2.msra.mxu0 0.0
  %850 = vmatprep.subr.mxu0 0.0
  %851 = vmatpush2.msra.mxu0 0.0
  %852 = vmatprep.subr.mxu0 0.0
  %853 = vmatpush2.msra.mxu0 0.0
  %854 = vmatprep.subr.mxu0 0.0
  %855 = vmatpush2.msra.mxu0 0.0
  %856 = vmatprep.subr.mxu0 0.0
  %857 = vmatpush2.msra.mxu0 0.0
  %858 = vmatprep.subr.mxu0 0.0
  %859 = vmatpush2.msra.mxu0 0.0
  %860 = vmatprep.subr.mxu0 0.0
  %861 = vmatpush2.msra.mxu0 0.0
  %862 = vmatprep.mubr.f32.mxu0 0.0
  %863 = vmatmul.mubr.f32.gmra.mxu0 %v703
  %v864 = vpop.f32.mrf.mxu0
  %v865 = vadd.f32 %v699, %v864
  %v866 = vpop.f32.mrf.mxu0
  %867 = vmatprep.mubr.f32.mxu0 0.0
  %868 = vmatmul.mubr.f32.gmra.mxu0 %v706
  %v869 = vpop.f32.mrf.mxu0
  %v870 = vadd.f32 %v699, %v869
  %v871 = vpop.f32.mrf.mxu0
  %872 = vmatprep.mubr.f32.mxu0 0.0
  %873 = vmatmul.mubr.f32.gmra.mxu0 %v709
  %v874 = vpop.f32.mrf.mxu0
  %v875 = vadd.f32 %v699, %v874
  %v876 = vpop.f32.mrf.mxu0
  %877 = vmatprep.mubr.f32.mxu0 0.0
  %878 = vmatmul.mubr.f32.gmra.mxu0 %v712
  %v879 = vpop.f32.mrf.mxu0
  %v880 = vadd.f32 %v699, %v879
  %v881 = vpop.f32.mrf.mxu0
  %882 = vmatprep.mubr.f32.mxu0 0.0
  %883 = vmatmul.mubr.f32.gmra.mxu0 %v715
  %v884 = vpop.f32.mrf.mxu0
  %v885 = vadd.f32 %v699, %v884
  %v886 = vpop.f32.mrf.mxu0
  %887 = vmatprep.mubr.f32.mxu0 0.0
  %888 = vmatmul.mubr.f32.gmra.mxu0 %v718
  %v889 = vpop.f32.mrf.mxu0
  %v890 = vadd.f32 %v699, %v889
  %v891 = vpop.f32.mrf.mxu0
  %892 = vmatprep.mubr.f32.mxu0 0.0
  %893 = vmatmul.mubr.f32.gmra.mxu0 %v721
  %v894 = vpop.f32.mrf.mxu0
  %v895 = vadd.f32 %v699, %v894
  %v896 = vpop.f32.mrf.mxu0
  %897 = vmatprep.mubr.f32.mxu0 0.0
  %898 = vmatmul.mubr.f32.gmra.mxu0 %v724
  %v899 = vpop.f32.mrf.mxu0
  %v900 = vadd.f32 %v699, %v899
  %v901 = vpop.f32.mrf.mxu0
  %902 = vmatprep.mubr.f32.mxu0 0.0
  %903 = vmatmul.mubr.f32.gmra.mxu0 %v727
  %v904 = vpop.f32.mrf.mxu0
  %v905 = vadd.f32 %v699, %v904
  %v906 = vpop.f32.mrf.mxu0
  %907 = vmatprep.mubr.f32.mxu0 0.0
  %908 = vmatmul.mubr.f32.gmra.mxu0 %v730
  %v909 = vpop.f32.mrf.mxu0
  %v910 = vadd.f32 %v699, %v909
  %v911 = vpop.f32.mrf.mxu0
  %912 = vmatprep.mubr.f32.mxu0 0.0
  %913 = vmatmul.mubr.f32.gmra.mxu0 %v733
  %v914 = vpop.f32.mrf.mxu0
  %v915 = vadd.f32 %v699, %v914
  %v916 = vpop.f32.mrf.mxu0
  %917 = vmatprep.mubr.f32.mxu0 0.0
  %918 = vmatmul.mubr.f32.gmra.mxu0 %v736
  %v919 = vpop.f32.mrf.mxu0
  %v920 = vadd.f32 %v699, %v919
  %v921 = vpop.f32.mrf.mxu0
  %922 = vmatprep.mubr.f32.mxu0 0.0
  %923 = vmatmul.mubr.f32.gmra.mxu0 %v739
  %v924 = vpop.f32.mrf.mxu0
  %v925 = vadd.f32 %v699, %v924
  %v926 = vpop.f32.mrf.mxu0
  %927 = vmatprep.mubr.f32.mxu0 0.0
  %928 = vmatmul.mubr.f32.gmra.mxu0 %v742
  %v929 = vpop.f32.mrf.mxu0
  %v930 = vadd.f32 %v699, %v929
  %v931 = vpop.f32.mrf.mxu0
  %932 = vmatprep.mubr.f32.mxu0 0.0
  %933 = vmatmul.mubr.f32.gmra.mxu0 %v745
  %v934 = vpop.f32.mrf.mxu0
  %v935 = vadd.f32 %v699, %v934
  %v936 = vpop.f32.mrf.mxu0
  %937 = vmatprep.mubr.f32.mxu0 0.0
  %938 = vmatmul.mubr.f32.gmra.mxu0 %v748
  %v939 = vpop.f32.mrf.mxu0
  %v940 = vadd.f32 %v699, %v939
  %v941 = vpop.f32.mrf.mxu0
  %942 = vmatprep.mubr.f32.mxu0 0.0
  %943 = vmatmul.mubr.f32.gmra.mxu0 %v751
  %v944 = vpop.f32.mrf.mxu0
  %v945 = vadd.f32 %v699, %v944
  %v946 = vpop.f32.mrf.mxu0
  %947 = vmatprep.mubr.f32.mxu0 0.0
  %948 = vmatmul.mubr.f32.gmra.mxu0 %v754
  %v949 = vpop.f32.mrf.mxu0
  %v950 = vadd.f32 %v699, %v949
  %v951 = vpop.f32.mrf.mxu0
  %952 = vmatprep.mubr.f32.mxu0 0.0
  %953 = vmatmul.mubr.f32.gmra.mxu0 %v757
  %v954 = vpop.f32.mrf.mxu0
  %v955 = vadd.f32 %v699, %v954
  %v956 = vpop.f32.mrf.mxu0
  %957 = vmatprep.mubr.f32.mxu0 0.0
  %958 = vmatmul.mubr.f32.gmra.mxu0 %v760
  %v959 = vpop.f32.mrf.mxu0
  %v960 = vadd.f32 %v699, %v959
  %v961 = vpop.f32.mrf.mxu0
  %962 = vmatprep.mubr.f32.mxu0 0.0
  %963 = vmatmul.mubr.f32.gmra.mxu0 %v763
  %v964 = vpop.f32.mrf.mxu0
  %v965 = vadd.f32 %v699, %v964
  %v966 = vpop.f32.mrf.mxu0
  %967 = vmatprep.mubr.f32.mxu0 0.0
  %968 = vmatmul.mubr.f32.gmra.mxu0 %v766
  %v969 = vpop.f32.mrf.mxu0
  %v970 = vadd.f32 %v699, %v969
  %v971 = vpop.f32.mrf.mxu0
  %972 = vmatprep.mubr.f32.mxu0 0.0
  %973 = vmatmul.mubr.f32.gmra.mxu0 %v769
  %v974 = vpop.f32.mrf.mxu0
  %v975 = vadd.f32 %v699, %v974
  %v976 = vpop.f32.mrf.mxu0
  %977 = vmatprep.mubr.f32.mxu0 0.0
  %978 = vmatmul.mubr.f32.gmra.mxu0 %v772
  %v979 = vpop.f32.mrf.mxu0
  %v980 = vadd.f32 %v699, %v979
  %v981 = vpop.f32.mrf.mxu0
  %982 = vmatprep.mubr.f32.mxu0 0.0
  %983 = vmatmul.mubr.f32.gmra.mxu0 %v775
  %v984 = vpop.f32.mrf.mxu0
  %v985 = vadd.f32 %v699, %v984
  %v986 = vpop.f32.mrf.mxu0
  %987 = vmatprep.mubr.f32.mxu0 0.0
  %988 = vmatmul.mubr.f32.gmra.mxu0 %v778
  %v989 = vpop.f32.mrf.mxu0
  %v990 = vadd.f32 %v699, %v989
  %v991 = vpop.f32.mrf.mxu0
  %992 = vmatprep.mubr.f32.mxu0 0.0
  %993 = vmatmul.mubr.f32.gmra.mxu0 %v781
  %v994 = vpop.f32.mrf.mxu0
  %v995 = vadd.f32 %v699, %v994
  %v996 = vpop.f32.mrf.mxu0
  %997 = vmatprep.mubr.f32.mxu0 0.0
  %998 = vmatmul.mubr.f32.gmra.mxu0 %v784
  %v999 = vpop.f32.mrf.mxu0
  %v1000 = vadd.f32 %v699, %v999
  %v1001 = vpop.f32.mrf.mxu0
  %1002 = vmatprep.mubr.f32.mxu0 0.0
  %1003 = vmatmul.mubr.f32.gmra.mxu0 %v787
  %v1004 = vpop.f32.mrf.mxu0
  %v1005 = vadd.f32 %v699, %v1004
  %v1006 = vpop.f32.mrf.mxu0
  %1007 = vmatprep.mubr.f32.mxu0 0.0
  %1008 = vmatmul.mubr.f32.gmra.mxu0 %v790
  %v1009 = vpop.f32.mrf.mxu0
  %v1010 = vadd.f32 %v699, %v1009
  %v1011 = vpop.f32.mrf.mxu0
  %1012 = vmatprep.mubr.f32.mxu0 0.0
  %1013 = vmatmul.mubr.f32.gmra.mxu0 %v793
  %v1014 = vpop.f32.mrf.mxu0
  %v1015 = vadd.f32 %v699, %v1014
  %v1016 = vpop.f32.mrf.mxu0
  %1017 = vmatprep.mubr.f32.mxu0 0.0
  %1018 = vmatmul.mubr.f32.gmra.mxu0 %v796
  %v1019 = vpop.f32.mrf.mxu0
  %v1020 = vadd.f32 %v699, %v1019
  %v1021 = vpop.f32.mrf.mxu0
  %1022 = vdwg.mxu0
  %vm1023 = vcmask 64512
  %1024 = vst.msk [vmem:[%s6] sm:$0xff] %vm1023, %v865
  %1025 = vst.msk [vmem:[%s6 + $0x8] sm:$0xff] %vm1023, %v870
  %1026 = vst.msk [vmem:[%s6 + $0x10] sm:$0xff] %vm1023, %v875
  %1027 = vst.msk [vmem:[%s6 + $0x18] sm:$0xff] %vm1023, %v880
  %1028 = vst.msk [vmem:[%s6 + $0x20] sm:$0xff] %vm1023, %v885
  %1029 = vst.msk [vmem:[%s6 + $0x28] sm:$0xff] %vm1023, %v890
  %1030 = vst.msk [vmem:[%s6 + $0x30] sm:$0xff] %vm1023, %v895
  %1031 = vst.msk [vmem:[%s6 + $0x38] sm:$0xff] %vm1023, %v900
  %1032 = vst.msk [vmem:[%s6 + $0x40] sm:$0xff] %vm1023, %v905
  %1033 = vst.msk [vmem:[%s6 + $0x48] sm:$0xff] %vm1023, %v910
  %1034 = vst.msk [vmem:[%s6 + $0x50] sm:$0xff] %vm1023, %v915
  %1035 = vst.msk [vmem:[%s6 + $0x58] sm:$0xff] %vm1023, %v920
  %1036 = vst.msk [vmem:[%s6 + $0x60] sm:$0xff] %vm1023, %v925
  %1037 = vst.msk [vmem:[%s6 + $0x68] sm:$0xff] %vm1023, %v930
  %1038 = vst.msk [vmem:[%s6 + $0x70] sm:$0xff] %vm1023, %v935
  %1039 = vst.msk [vmem:[%s6 + $0x78] sm:$0xff] %vm1023, %v940
  %1040 = vst.msk [vmem:[%s6 + $0x80] sm:$0xff] %vm1023, %v945
  %1041 = vst.msk [vmem:[%s6 + $0x88] sm:$0xff] %vm1023, %v950
  %1042 = vst.msk [vmem:[%s6 + $0x90] sm:$0xff] %vm1023, %v955
  %1043 = vst.msk [vmem:[%s6 + $0x98] sm:$0xff] %vm1023, %v960
  %1044 = vst.msk [vmem:[%s6 + $0xa0] sm:$0xff] %vm1023, %v965
  %1045 = vst.msk [vmem:[%s6 + $0xa8] sm:$0xff] %vm1023, %v970
  %1046 = vst.msk [vmem:[%s6 + $0xb0] sm:$0xff] %vm1023, %v975
  %1047 = vst.msk [vmem:[%s6 + $0xb8] sm:$0xff] %vm1023, %v980
  %1048 = vst.msk [vmem:[%s6 + $0xc0] sm:$0xff] %vm1023, %v985
  %1049 = vst.msk [vmem:[%s6 + $0xc8] sm:$0xff] %vm1023, %v990
  %1050 = vst.msk [vmem:[%s6 + $0xd0] sm:$0xff] %vm1023, %v995
  %1051 = vst.msk [vmem:[%s6 + $0xd8] sm:$0xff] %vm1023, %v1000
  %1052 = vst.msk [vmem:[%s6 + $0xe0] sm:$0xff] %vm1023, %v1005
  %1053 = vst.msk [vmem:[%s6 + $0xe8] sm:$0xff] %vm1023, %v1010
  %1054 = vst.msk [vmem:[%s6 + $0xf0] sm:$0xff] %vm1023, %v1015
  %1055 = vst.msk [vmem:[%s6 + $0xf8] sm:$0xff] %vm1023, %v1020
  // Predicated region
  $region30: #{tpu_custom_call.1} parent=0 // pred_check
    _
  $region31: #{tpu_custom_call.1} parent=0 // pred_check_branch
    %1057 = sbr.rel (0) target = $region33
  $region32: #{tpu_custom_call.1} parent=0 // pred_region
    _
  $region33: #{tpu_custom_call.1} parent=0 // pred_fallthru
    _
  // Predicated region
  $region34: #{tpu_custom_call.1} parent=0 // pred_check
    _
  $region35: #{tpu_custom_call.1} parent=0 // pred_check_branch
    %1059 = sbr.rel (0) target = $region37
  $region36: #{tpu_custom_call.1} parent=0 // pred_region
    _
  $region37: #{tpu_custom_call.1} parent=0 // pred_fallthru
    _

</llo_original>
